<compile_context>
chip_gen: v6e
topology: v6e:2x2x1
jax: 0.10.0
libtpu: 0.0.40
codegen_flags: <defaults>
</compile_context>

<pallas_src>
import functools

import jax
import jax.numpy as jnp
from jax import lax
from jax.experimental import pallas as pl
from jax.experimental.pallas import tpu as pltpu

_LANES = 128
_SUBLANES = 8


def _round_up(x, m):
    return ((x + m - 1) // m) * m


def _sublane_multiple(dtype) -> int:
    """Packed sublane tile height: 8 (32-bit), 16 (16-bit), 32 (8-bit)."""
    itemsize = jnp.dtype(dtype).itemsize
    return _SUBLANES * max(1, 4 // max(1, itemsize))


def _hinge_disc_cutmix_kernel(pred_ref, label_ref, partial_ref, *,
                              tile_rows, valid_rows, needs_mask):
    """Per-tile partial sums of the CutMix hinge discriminator loss.

    pred_ref / label_ref : (tile_rows, 128) VMEM tiles (native input dtypes)
    partial_ref          : (2, 128) f32 output block
                           row 0 = sum of "real" hinge terms in this tile
                           row 1 = sum of "fake" hinge terms in this tile
    """
    # Upcast inside the kernel: keeps HBM traffic at the input dtype width
    # (bf16/int8 labels stay narrow in HBM); the VPU cast hides under DMA.
    p = pred_ref[...].astype(jnp.float32)
    lab = label_ref[...].astype(jnp.float32)

    zero = jnp.float32(0.0)
    real_term = jnp.minimum(zero, p - 1.0) * lab
    fake_term = jnp.minimum(zero, -p - 1.0) * (1.0 - lab)

    def fold_and_store(real, fake):
        # (tile_rows,128) -> (8,128): tile-aligned reshape + leading-axis sum
        # = pure cross-vreg VPU adds.  Then an (8,128)->(1,128) sublane fold on
        # the otherwise-idle XLU shrinks the per-step output DMA 8x.
        real8 = real.reshape(-1, _SUBLANES, _LANES).sum(axis=0)
        fake8 = fake.reshape(-1, _SUBLANES, _LANES).sum(axis=0)
        partial_ref[0:1, :] = real8.sum(axis=0, keepdims=True)
        partial_ref[1:2, :] = fake8.sum(axis=0, keepdims=True)

    if needs_mask:
        # Only the last grid step can contain out-of-bounds (garbage) rows;
        # gate the mask there so interior tiles stay purely memory-bound.
        i = pl.program_id(0)
        last = pl.num_programs(0) - 1

        @pl.when(i != last)
        def _():
            fold_and_store(real_term, fake_term)

        @pl.when(i == last)
        def _():
            row_ids = lax.broadcasted_iota(jnp.int32, p.shape, 0) + i * tile_rows
            valid = row_ids < valid_rows
            fold_and_store(jnp.where(valid, real_term, zero),
                           jnp.where(valid, fake_term, zero))
    else:
        fold_and_store(real_term, fake_term)


def hinge_discriminator_loss_cutmix(prediction, label, *,
                                    tile_rows=2048, core_parallel=False):
    """JAX/Pallas equivalent of HingeDiscriminatorLossCutMix.forward.

    prediction / label may be any float (or integer 0/1 mask) dtype; they are
    upcast to f32 inside the kernel, so passing a bf16/int8 CutMix label mask
    halves/quarters its HBM traffic for free.  Set core_parallel=True on v7x
    to shard the grid across both TensorCores (pltpu.CORE_PARALLEL).
    """
    assert prediction.shape == label.shape, "prediction/label shapes must match"
    n = int(prediction.size)
    assert n > 0, "empty input"

    pred_f = prediction.reshape(-1)
    lab_f = label.reshape(-1)

    # Split off the sub-128-element tail (rare ragged case); it is reduced by a
    # tiny XLA expression below so the main pallas_call needs no padding copy.
    n_tail = n % _LANES
    n_main = n - n_tail

    sum_real = jnp.float32(0.0)
    sum_fake = jnp.float32(0.0)

    if n_main:
        rows = n_main // _LANES
        pred2 = (pred_f[:n_main] if n_tail else pred_f).reshape(rows, _LANES)
        lab2 = (lab_f[:n_main] if n_tail else lab_f).reshape(rows, _LANES)

        # Round the tile height to the packed sublane tile of the narrowest
        # input dtype (8 f32 / 16 bf16 / 32 int8), clamp to the array.
        sub_m = max(_sublane_multiple(pred2.dtype), _sublane_multiple(lab2.dtype))
        t_rows = _round_up(max(int(tile_rows), sub_m), sub_m)
        t_rows = min(t_rows, _round_up(rows, sub_m))
        num_blocks = pl.cdiv(rows, t_rows)
        needs_mask = (num_blocks * t_rows != rows)

        kernel = functools.partial(
            _hinge_disc_cutmix_kernel,
            tile_rows=t_rows, valid_rows=rows, needs_mask=needs_mask)

        # VMEM budget: 2 double-buffered input tiles + ~4 full-tile f32
        # intermediates.  Only raise the scoped limit when actually needed
        # (user-supplied large tile_rows); cap at 64 MiB (v7x physical VMEM).
        io_bytes = 2 * t_rows * _LANES * (pred2.dtype.itemsize + lab2.dtype.itemsize)
        interm_bytes = 4 * t_rows * _LANES * 4
        est_bytes = io_bytes + interm_bytes + (1 << 20)

        semantics = (pltpu.CORE_PARALLEL if core_parallel else "parallel",)
        cp_kwargs = dict(dimension_semantics=semantics)
        if est_bytes > (12 << 20):
            cp_kwargs["vmem_limit_bytes"] = int(min(est_bytes, 64 << 20))

        partials = pl.pallas_call(
            kernel,
            out_shape=jax.ShapeDtypeStruct((num_blocks, 2, _LANES), jnp.float32),
            grid_spec=pltpu.PrefetchScalarGridSpec(
                num_scalar_prefetch=0,
                grid=(num_blocks,),
                in_specs=[
                    pl.BlockSpec((t_rows, _LANES), lambda i: (i, 0)),
                    pl.BlockSpec((t_rows, _LANES), lambda i: (i, 0)),
                ],
                out_specs=pl.BlockSpec((None, 2, _LANES), lambda i: (i, 0, 0)),
            ),
            compiler_params=pltpu.CompilerParams(**cp_kwargs),
        )(pred2, lab2)

        main_sums = jnp.sum(partials, axis=(0, 2), dtype=jnp.float32)   # (2,)
        sum_real = sum_real + main_sums[0]
        sum_fake = sum_fake + main_sums[1]

    if n_tail:
        # < 128 elements: negligible, keep it in plain XLA.
        tp = pred_f[n_main:].astype(jnp.float32)
        tl = lab_f[n_main:].astype(jnp.float32)
        sum_real = sum_real + jnp.sum(jnp.minimum(0.0, tp - 1.0) * tl)
        sum_fake = sum_fake + jnp.sum(jnp.minimum(0.0, -tp - 1.0) * (1.0 - tl))

    inv_n = jnp.float32(1.0 / n)
    loss_real = -sum_real * inv_n
    loss_fake = -sum_fake * inv_n
    return loss_real, loss_fake


def _reference(prediction, label):
    p = prediction.astype(jnp.float32)
    lab = label.astype(jnp.float32)
    loss_real = -jnp.mean(jnp.minimum(0.0, p - 1.0) * lab)
    loss_fake = -jnp.mean(jnp.minimum(0.0, -p - 1.0) * (1.0 - lab))
    return loss_real, loss_fake


if __name__ == "__main__":
    key = jax.random.PRNGKey(0)
    ks = jax.random.split(key, 6)

    # 1) Typical discriminator per-pixel prediction map (NCHW) + CutMix 0/1 label.
    shape = (2, 4, 16, 16)
    pred = jax.random.normal(ks[0], shape, dtype=jnp.float32)
    lab = jax.random.bernoulli(ks[1], 0.5, shape).astype(jnp.float32)
    lr, lf = hinge_discriminator_loss_cutmix(pred, lab)
    jax.block_until_ready((lr, lf))
    rr, rf = _reference(pred, lab)
    assert jnp.allclose(lr, rr, atol=1e-5, rtol=1e-5), (lr, rr)
    assert jnp.allclose(lf, rf, atol=1e-5, rtol=1e-5), (lf, rf)

    # 2) Multi-block grid with a partial last tile (exercises the pl.when-gated mask).
    shape2 = (2, 3, 16, 32)   # 3072 elems -> 24 rows; tile_rows=16 -> 2 blocks
    pred2 = jax.random.normal(ks[2], shape2, dtype=jnp.float32)
    lab2 = jax.random.bernoulli(ks[3], 0.5, shape2).astype(jnp.float32)
    lr2, lf2 = hinge_discriminator_loss_cutmix(pred2, lab2, tile_rows=16)
    jax.block_until_ready((lr2, lf2))
    rr2, rf2 = _reference(pred2, lab2)
    assert jnp.allclose(lr2, rr2, atol=1e-5, rtol=1e-5), (lr2, rr2)
    assert jnp.allclose(lf2, rf2, atol=1e-5, rtol=1e-5), (lf2, rf2)

    # 3) Ragged element count (sub-128 tail via the wrapper reduce) + bf16 label
    #    mask (exercises the 16-row packed-sublane tile rounding).
    shape3 = (1, 3, 7, 11)    # 231 elems
    pred3 = jax.random.normal(ks[4], shape3, dtype=jnp.float32)
    lab3 = jax.random.bernoulli(ks[5], 0.5, shape3).astype(jnp.bfloat16)
    lr3, lf3 = hinge_discriminator_loss_cutmix(pred3, lab3)
    jax.block_until_ready((lr3, lf3))
    rr3, rf3 = _reference(pred3, lab3.astype(jnp.float32))
    assert jnp.allclose(lr3, rr3, atol=1e-5, rtol=1e-5), (lr3, rr3)
    assert jnp.allclose(lf3, rf3, atol=1e-5, rtol=1e-5), (lf3, rf3)

    print("KERNEL_OK")
</pallas_src>

<mosaic_0001>
module attributes {stable_mosaic.version = 11 : i64} {
  func.func @_hinge_disc_cutmix_kernel(%arg0: i32, %arg1: memref<16x128xf32, #tpu.memory_space<vmem>>, %arg2: memref<16x128xf32, #tpu.memory_space<vmem>>, %arg3: memref<1x2x128xf32, #tpu.memory_space<vmem>>) attributes {dimension_semantics = [#tpu.dimension_semantics<parallel>], iteration_bounds = array<i64: 1>, scalar_prefetch = 0 : i64, scratch_operands = 0 : i64, tpu.core_type = #tpu.core_type<tc>, window_params = [{transform_indices = @transform_0, window_bounds = array<i64: 16, 128>}, {transform_indices = @transform_1, window_bounds = array<i64: 16, 128>}, {transform_indices = @transform_2, window_bounds = array<i64: 1, 2, 128>}]} {
    %c0 = arith.constant 0 : index
    %c0_0 = arith.constant 0 : index
    %0 = vector.load %arg1[%c0, %c0_0] : memref<16x128xf32, #tpu.memory_space<vmem>>, vector<16x128xf32>
    %c0_1 = arith.constant 0 : index
    %c0_2 = arith.constant 0 : index
    %1 = vector.load %arg2[%c0_1, %c0_2] : memref<16x128xf32, #tpu.memory_space<vmem>>, vector<16x128xf32>
    %cst = arith.constant 1.000000e+00 : f32
    %2 = vector.broadcast %cst : f32 to vector<16x128xf32>
    %3 = arith.subf %0, %2 : vector<16x128xf32>
    %cst_3 = arith.constant 0.000000e+00 : f32
    %4 = vector.broadcast %cst_3 : f32 to vector<16x128xf32>
    %5 = arith.minimumf %4, %3 : vector<16x128xf32>
    %6 = arith.mulf %5, %1 : vector<16x128xf32>
    %cst_4 = arith.constant 0.000000e+00 : f32
    %7 = vector.broadcast %cst_4 : f32 to vector<16x128xf32>
    %8 = arith.subf %7, %0 : vector<16x128xf32>
    %cst_5 = arith.constant 1.000000e+00 : f32
    %9 = vector.broadcast %cst_5 : f32 to vector<16x128xf32>
    %10 = arith.subf %8, %9 : vector<16x128xf32>
    %cst_6 = arith.constant 0.000000e+00 : f32
    %11 = vector.broadcast %cst_6 : f32 to vector<16x128xf32>
    %12 = arith.minimumf %11, %10 : vector<16x128xf32>
    %cst_7 = arith.constant 1.000000e+00 : f32
    %13 = vector.broadcast %cst_7 : f32 to vector<16x128xf32>
    %14 = arith.subf %13, %1 : vector<16x128xf32>
    %15 = arith.mulf %12, %14 : vector<16x128xf32>
    %16 = vector.shape_cast %6 : vector<16x128xf32> to vector<2x8x128xf32>
    %cst_8 = arith.constant dense<0.000000e+00> : vector<8x128xf32>
    %17 = vector.multi_reduction <add>, %16, %cst_8 [0] : vector<2x8x128xf32> to vector<8x128xf32>
    %18 = vector.shape_cast %15 : vector<16x128xf32> to vector<2x8x128xf32>
    %cst_9 = arith.constant dense<0.000000e+00> : vector<8x128xf32>
    %19 = vector.multi_reduction <add>, %18, %cst_9 [0] : vector<2x8x128xf32> to vector<8x128xf32>
    %cst_10 = arith.constant dense<0.000000e+00> : vector<128xf32>
    %20 = vector.multi_reduction <add>, %17, %cst_10 [0] : vector<8x128xf32> to vector<128xf32>
    %21 = vector.shape_cast %20 : vector<128xf32> to vector<1x128xf32>
    %c0_11 = arith.constant 0 : index
    %c0_12 = arith.constant 0 : index
    %c0_13 = arith.constant 0 : index
    %22 = vector.load %arg3[%c0_11, %c0_12, %c0_13] : memref<1x2x128xf32, #tpu.memory_space<vmem>>, vector<1x1x128xf32>
    %23 = vector.shape_cast %22 : vector<1x1x128xf32> to vector<1x128xf32>
    %24 = vector.shape_cast %21 : vector<1x128xf32> to vector<1x1x128xf32>
    tpu.vector_store %arg3[%c0_11, %c0_12, %c0_13], %24 {strides = array<i32>} : memref<1x2x128xf32, #tpu.memory_space<vmem>>, vector<1x1x128xf32>,
    %cst_14 = arith.constant dense<0.000000e+00> : vector<128xf32>
    %25 = vector.multi_reduction <add>, %19, %cst_14 [0] : vector<8x128xf32> to vector<128xf32>
    %26 = vector.shape_cast %25 : vector<128xf32> to vector<1x128xf32>
    %c0_15 = arith.constant 0 : index
    %c1 = arith.constant 1 : index
    %c0_16 = arith.constant 0 : index
    %27 = vector.load %arg3[%c0_15, %c1, %c0_16] : memref<1x2x128xf32, #tpu.memory_space<vmem>>, vector<1x1x128xf32>
    %28 = vector.shape_cast %27 : vector<1x1x128xf32> to vector<1x128xf32>
    %29 = vector.shape_cast %26 : vector<1x128xf32> to vector<1x1x128xf32>
    tpu.vector_store %arg3[%c0_15, %c1, %c0_16], %29 {strides = array<i32>} : memref<1x2x128xf32, #tpu.memory_space<vmem>>, vector<1x1x128xf32>,
    return
  }
  func.func @transform_0(%arg0: i32) -> (i32, i32) {
    %c0_i32 = arith.constant 0 : i32
    %c0_i32_0 = arith.constant 0 : i32
    return %arg0, %c0_i32 : i32, i32
  }
  func.func @transform_1(%arg0: i32) -> (i32, i32) {
    %c0_i32 = arith.constant 0 : i32
    %c0_i32_0 = arith.constant 0 : i32
    return %arg0, %c0_i32 : i32, i32
  }
  func.func @transform_2(%arg0: i32) -> (i32, i32, i32) {
    %c0_i32 = arith.constant 0 : i32
    %c0_i32_0 = arith.constant 0 : i32
    %c0_i32_1 = arith.constant 0 : i32
    return %arg0, %c0_i32, %c0_i32_0 : i32, i32, i32
  }
}

</mosaic_0001>

<llo_original>
// kernel: tpu_custom_call.1
$region0: #{tpu_custom_call.1}
  #allocation0 [shape = 'u32[]', space=smem, size = 0x4, offset = 0x4, fixed_abs, tag = 'smem constant byte address 0x4 - core index']
  #allocation1 [shape = 'u32[144,128]{1,0:T(1,128)}', space=vmem, size = 0x12000, scoped, tag = 'internal scratch']
  %s0 = inlined_call_operand.hbm [shape: f32[16,128], index: 0, kind: input, shape index: {}]
  %s1 = inlined_call_operand.hbm [shape: f32[16,128], index: 1, kind: input, shape index: {}]
  %s2 = inlined_call_operand.hbm [shape: f32[1,2,128], index: 2, kind: output, shape index: {}]
  %s3 = sld [smem:[#allocation0]]
  $region26: #{tpu_custom_call.1} parent=0
    _
  %s5 = ssub.s32 1, %s3
  %s6 = scalar_select 0, %s5, %s3
  $region1: #{tpu_custom_call.1} parent=0
    #allocation2 [shape = 'u8[8192]{0}', space=vmem, size = 0x2000, scoped, tag = 'input window, operand 0, single buffered']
    #allocation3 [shape = 's32[1]{0}', space=sflag, size = 0x4, scoped, tag = 'scoped memory for tpu_custom_call.1']
    #allocation4 [shape = 's32[1]{0}', space=sflag, size = 0x4, scoped, tag = 'scoped memory for tpu_custom_call.1']
    #allocation5 [shape = 'u8[8192]{0}', space=vmem, size = 0x2000, scoped, tag = 'input window, operand 1, single buffered']
    #allocation6 [shape = 's32[1]{0}', space=sflag, size = 0x4, scoped, tag = 'scoped memory for tpu_custom_call.1']
    #allocation7 [shape = 'u8[1024]{0}', space=vmem, size = 0x400, scoped, tag = 'output window, operand 0, single buffered']
    %7 = vsyncpa [#allocation3], 0
    %8 = vsyncpa [#allocation6], 0
    %9 = vsyncpa [#allocation4], 0
    // Predicated region
    $region2: #{tpu_custom_call.1} parent=1 // pred_check
      _
    $region3: #{tpu_custom_call.1} parent=1 // pred_check_branch
      %11 = sbr.rel (0) target = $region5
    $region4: #{tpu_custom_call.1} parent=1 // pred_region
      %s13 = ssub.s32 256, 256
      %14 = vsyncadd [#allocation3], %s13
      %s15 = sshll.u32 [#allocation2], 4
      %s16 = int_to_ptr.vmem [resolvable:$true] %s15
      %21 = dma.hbm_to_vmem [thread:$0]  %s0, 256, %s16, [#allocation3], 128, 128, 8
    $region5: #{tpu_custom_call.1} parent=1 // pred_fallthru
      _
    // Predicated region
    $region6: #{tpu_custom_call.1} parent=1 // pred_check
      _
    $region7: #{tpu_custom_call.1} parent=1 // pred_check_branch
      %23 = sbr.rel (0) target = $region9
    $region8: #{tpu_custom_call.1} parent=1 // pred_region
      %s25 = ssub.s32 256, 256
      %26 = vsyncadd [#allocation6], %s25
      %s27 = sshll.u32 [#allocation5], 4
      %s28 = int_to_ptr.vmem [resolvable:$true] %s27
      %33 = dma.hbm_to_vmem [thread:$0]  %s1, 256, %s28, [#allocation6], 128, 128, 8
    $region9: #{tpu_custom_call.1} parent=1 // pred_fallthru
      _
    // Predicated region
    $region10: #{tpu_custom_call.1} parent=1 // pred_check
      _
    $region11: #{tpu_custom_call.1} parent=1 // pred_check_branch
      %35 = sbr.rel (0) target = $region13
    $region12: #{tpu_custom_call.1} parent=1 // pred_region
      %36 = dma.done [#allocation3], 256
    $region13: #{tpu_custom_call.1} parent=1 // pred_fallthru
      _
    // Predicated region
    $region14: #{tpu_custom_call.1} parent=1 // pred_check
      _
    $region15: #{tpu_custom_call.1} parent=1 // pred_check_branch
      %38 = sbr.rel (0) target = $region17
    $region16: #{tpu_custom_call.1} parent=1 // pred_region
      %39 = dma.done [#allocation6], 256
    $region17: #{tpu_custom_call.1} parent=1 // pred_fallthru
      _
    %v40 = vld [vmem:[#allocation2] sm:$0xff]
    %v41 = vld [vmem:[#allocation2 + $0x8] sm:$0xff]
    %v42 = vld [vmem:[#allocation5] sm:$0xff]
    %v43 = vld [vmem:[#allocation5 + $0x8] sm:$0xff]
    %v44 = vsub.f32 %v40, 1.0
    %v45 = vsub.f32 %v41, 1.0
    %v46 = vmin.f32 %v44, 0.0
    %v47 = vmin.f32 %v45, 0.0
    %v48 = vmul.f32 %v46, %v42
    %v49 = vmul.f32 %v47, %v43
    %v50 = vsub.f32 0.0, %v40
    %v51 = vsub.f32 0.0, %v41
    %v52 = vsub.f32 %v50, 1.0
    %v53 = vsub.f32 %v51, 1.0
    %v54 = vmin.f32 %v52, 0.0
    %v55 = vmin.f32 %v53, 0.0
    %v56 = vsub.f32 1.0, %v42
    %v57 = vsub.f32 1.0, %v43
    %v58 = vmul.f32 %v54, %v56
    %v59 = vmul.f32 %v55, %v57
    %v60 = vadd.f32 %v48, %v49
    %v61 = vadd.f32 %v58, %v59
    %v62 = vrot.slane %v60, 4
    %v63 = vadd.f32 %v60, %v62
    %v64 = vrot.slane %v63, 2
    %v65 = vadd.f32 %v63, %v64
    %v66 = vrot.slane %v65, 1
    %v67 = vadd.f32 %v65, %v66
    %68 = vst [vmem:[#allocation7] sm:$0x1] %v67
    %v69 = vrot.slane %v61, 4
    %v70 = vadd.f32 %v61, %v69
    %v71 = vrot.slane %v70, 2
    %v72 = vadd.f32 %v70, %v71
    %v73 = vrot.slane %v72, 1
    %v74 = vadd.f32 %v72, %v73
    %75 = vst [vmem:[#allocation7 + $0x1] sm:$0x1] %v74
    // Predicated region
    $region18: #{tpu_custom_call.1} parent=1 // pred_check
      _
    $region19: #{tpu_custom_call.1} parent=1 // pred_check_branch
      %77 = sbr.rel (0) target = $region21
    $region20: #{tpu_custom_call.1} parent=1 // pred_region
      %s79 = ssub.s32 32, 32
      %80 = vsyncadd [#allocation4], %s79
      %s82 = sshll.u32 [#allocation7], 4
      %s83 = int_to_ptr.vmem [resolvable:$true] %s82
      %85 = dma.vmem_to_hbm [thread:$0]  %s83, 32, %s2, [#allocation4]
    $region21: #{tpu_custom_call.1} parent=1 // pred_fallthru
      _
    // Predicated region
    $region22: #{tpu_custom_call.1} parent=1 // pred_check
      _
    $region23: #{tpu_custom_call.1} parent=1 // pred_check_branch
      %87 = sbr.rel (0) target = $region25
    $region24: #{tpu_custom_call.1} parent=1 // pred_region
      %88 = dma.done [#allocation4], 32
    $region25: #{tpu_custom_call.1} parent=1 // pred_fallthru
      _
    %89 = vsyncpa [#allocation3], 1
    %90 = vsyncpa [#allocation6], 1
    %91 = vsyncpa [#allocation4], 1

</llo_original>
